<compile_context>
chip_gen: v7x
topology: tpu7x:2x2x1
jax: 0.10.0
libtpu: 0.0.40
codegen_flags: <defaults>
</compile_context>

<pallas_src>
import functools

import jax
import jax.numpy as jnp
from jax import lax
from jax.experimental import pallas as pl
from jax.experimental.pallas import tpu as pltpu


def _critic_kernel(x_ref, w1_ref, w2_ref, bw_ref, b3_ref, out_ref, *,
                   bf16_epilogue):
    """One batch tile, computed feature-major (batch along lanes).

    x_ref  : (TILE_B, num_state) f32   -- streamed batch tile (native layout)
    w1_ref : (hidden, num_state) bf16  -- PyTorch nn.Linear (out, in) layout
    w2_ref : (hidden, hidden)    bf16
    bw_ref : (hidden, 3)         f32   -- columns: [b1, b2, fc3.weight.T]
    b3_ref : (1, 1)              f32   -- SMEM scalar
    out_ref: (1, TILE_B)         f32   -- lane-dense value row
    """
    x_bf16 = x_ref[...].astype(jnp.bfloat16)          # (TILE_B, S)
    b1 = bw_ref[:, 0:1]                               # (H, 1) f32
    b2 = bw_ref[:, 1:2]                               # (H, 1) f32
    w3 = bw_ref[:, 2:3]                               # (H, 1) f32

    # fc1: contract num_state of both operands -> (hidden, TILE_B), MXU.
    dnums = (((1,), (1,)), ((), ()))
    if bf16_epilogue:
        # v6e/v7x: bf16 VALU -> do bias+relu in bf16, no separate cast pass.
        h1 = lax.dot_general(w1_ref[...], x_bf16, dnums,
                             preferred_element_type=jnp.bfloat16)
        h1 = jnp.maximum(h1 + b1.astype(jnp.bfloat16), 0.0)
    else:
        # v5e / fallback: f32 epilogue, then cast for the fc2 matmul.
        h1 = lax.dot_general(w1_ref[...], x_bf16, dnums,
                             preferred_element_type=jnp.float32)
        h1 = jnp.maximum(h1 + b1, 0.0).astype(jnp.bfloat16)

    # fc2 + relu: (hidden, hidden) @ (hidden, TILE_B), MXU, f32 accumulate.
    h2 = jnp.dot(w2_ref[...], h1, preferred_element_type=jnp.float32)
    h2 = jnp.maximum(h2 + b2, 0.0)

    # fc3 (out dim 1): VPU multiply + sublane reduce; already lane-dense.
    v = jnp.sum(h2 * w3, axis=0, keepdims=True) + b3_ref[0, 0]
    out_ref[...] = v.astype(out_ref.dtype)


def _round_up(x, m):
    return ((x + m - 1) // m) * m


def _select_tile(B, tile_b):
    """Pick a batch tile: whole batch if small, else >=2 lane-aligned tiles."""
    if B <= 256:
        return B, 1
    half = _round_up(pl.cdiv(B, 2), 256)       # guarantees >= 2 grid steps
    tb = min(max(_round_up(tile_b, 256), 256), half)
    return tb, pl.cdiv(B, tb)


def critic_forward(x, kparams, *, tile_b=2048, bf16_epilogue=None):
    """x: (B, num_state) f32, kparams from prepare_critic_params -> (B, 1) f32."""
    B, num_state = x.shape
    hidden = kparams["w1"].shape[0]

    if bf16_epilogue is None:
        try:
            kind = jax.devices()[0].device_kind.lower()
            bf16_epilogue = ("v6" in kind) or ("v7" in kind) or ("7x" in kind)
        except Exception:  # pragma: no cover - conservative fallback
            bf16_epilogue = False

    tile_b, n_tiles = _select_tile(B, tile_b)

    w1, w2, bw, b3 = kparams["w1"], kparams["w2"], kparams["bw"], kparams["b3"]

    cost = pl.CostEstimate(
        flops=2 * B * (num_state * hidden + hidden * hidden + hidden),
        transcendentals=0,
        bytes_accessed=int(x.size * 4 + w1.size * 2 + w2.size * 2
                           + bw.size * 4 + b3.size * 4 + B * 4),
    )

    kernel = functools.partial(_critic_kernel, bf16_epilogue=bool(bf16_epilogue))

    out = pl.pallas_call(
        kernel,
        out_shape=jax.ShapeDtypeStruct((1, B), jnp.float32),
        grid=(n_tiles,),
        in_specs=[
            pl.BlockSpec((tile_b, num_state), lambda i: (i, 0)),   # x (streamed)
            pl.BlockSpec((hidden, num_state), lambda i: (0, 0)),   # w1 (resident)
            pl.BlockSpec((hidden, hidden), lambda i: (0, 0)),      # w2 (resident)
            pl.BlockSpec((hidden, 3), lambda i: (0, 0)),           # b1|b2|w3 packed
            pl.BlockSpec(memory_space=pltpu.MemorySpace.SMEM),     # b3 scalar
        ],
        out_specs=pl.BlockSpec((1, tile_b), lambda i: (0, i)),
        compiler_params=pltpu.CompilerParams(
            dimension_semantics=("parallel",)),
        cost_estimate=cost,
    )(x, w1, w2, bw, b3)

    return out.reshape(B, 1)


def init_critic_params(key, num_state, hidden_layer=128):
    """PyTorch-style nn.Linear init, native (out_features, in_features) layout."""
    ks = jax.random.split(key, 6)

    def unif(k, shape, fan_in):
        bound = 1.0 / jnp.sqrt(jnp.float32(fan_in))
        return jax.random.uniform(k, shape, jnp.float32, -bound, bound)

    return {
        "w1": unif(ks[0], (hidden_layer, num_state), num_state),
        "b1": unif(ks[1], (hidden_layer,), num_state),
        "w2": unif(ks[2], (hidden_layer, hidden_layer), hidden_layer),
        "b2": unif(ks[3], (hidden_layer,), hidden_layer),
        "w3": unif(ks[4], (1, hidden_layer), hidden_layer),
        "b3": unif(ks[5], (1,), hidden_layer),
    }


def prepare_critic_params(params):
    """One-time conversion to the kernel-ready layout (bf16 matmul weights,
    b1/b2/fc3-weight packed into one (hidden, 3) f32 tile, b3 as SMEM scalar)."""
    hidden = params["w1"].shape[0]
    bw = jnp.concatenate(
        [params["b1"].reshape(hidden, 1),
         params["b2"].reshape(hidden, 1),
         params["w3"].reshape(hidden, 1)], axis=1).astype(jnp.float32)
    return {
        "w1": params["w1"].astype(jnp.bfloat16),
        "w2": params["w2"].astype(jnp.bfloat16),
        "bw": bw,
        "b3": params["b3"].reshape(1, 1).astype(jnp.float32),
    }


def critic_reference(x, params):
    """Pure-JAX f32 reference of the PyTorch forward pass."""
    h1 = jax.nn.relu(x @ params["w1"].T + params["b1"])
    h2 = jax.nn.relu(h1 @ params["w2"].T + params["b2"])
    return h2 @ params["w3"].T + params["b3"]


if __name__ == "__main__":
    key = jax.random.PRNGKey(0)
    k_params, k_x = jax.random.split(key)

    batch, num_state, hidden = 8, 16, 128
    params = init_critic_params(k_params, num_state, hidden)
    kparams = prepare_critic_params(params)
    x = jax.random.normal(k_x, (batch, num_state), jnp.float32)

    # Small single-tile run (grid of 1, whole-batch block).
    value = jax.block_until_ready(critic_forward(x, kparams))
    ref = critic_reference(x, params)
    assert value.shape == (batch, 1), value.shape
    assert jnp.allclose(value, ref, atol=5e-2, rtol=5e-2), (
        f"mismatch: max abs err {jnp.max(jnp.abs(value - ref))}"
    )

    # Multi-tile run with a ragged batch (2 tiles of 512 covering B=1000;
    # exercises the >=2-step grid and masked last-tile writes, no host pad).
    big_batch = 1000
    xb = jax.random.normal(jax.random.PRNGKey(1), (big_batch, num_state),
                           jnp.float32)
    vb = jax.block_until_ready(critic_forward(xb, kparams))
    rb = critic_reference(xb, params)
    assert vb.shape == (big_batch, 1), vb.shape
    assert jnp.allclose(vb, rb, atol=5e-2, rtol=5e-2), (
        f"mismatch: max abs err {jnp.max(jnp.abs(vb - rb))}"
    )

    print("KERNEL_OK")
</pallas_src>

<mosaic_0001>
module attributes {stable_mosaic.version = 11 : i64} {
  func.func @_critic_kernel(%arg0: i32, %arg1: memref<8x16xf32, #tpu.memory_space<vmem>>, %arg2: memref<128x16xbf16, #tpu.memory_space<vmem>>, %arg3: memref<128x128xbf16, #tpu.memory_space<vmem>>, %arg4: memref<128x3xf32, #tpu.memory_space<vmem>>, %arg5: memref<1x1xf32, #tpu.memory_space<smem>>, %arg6: memref<1x8xf32, #tpu.memory_space<vmem>>) attributes {dimension_semantics = [#tpu.dimension_semantics<parallel>], iteration_bounds = array<i64: 1>, scalar_prefetch = 0 : i64, scratch_operands = 0 : i64, tpu.core_type = #tpu.core_type<tc>, window_params = [{transform_indices = @transform_0, window_bounds = array<i64: 8, 16>}, {pipeline_mode = #tpu.pipeline_mode<synchronous>, transform_indices = @transform_1, window_bounds = array<i64: 128, 16>}, {pipeline_mode = #tpu.pipeline_mode<synchronous>, transform_indices = @transform_2, window_bounds = array<i64: 128, 128>}, {pipeline_mode = #tpu.pipeline_mode<synchronous>, transform_indices = @transform_3, window_bounds = array<i64: 128, 3>}, {transform_indices = @transform_4, window_bounds = array<i64: 1, 1>}, {transform_indices = @transform_5, window_bounds = array<i64: 1, 8>}]} {
    %c0 = arith.constant 0 : index
    %c0_0 = arith.constant 0 : index
    %0 = vector.load %arg1[%c0, %c0_0] : memref<8x16xf32, #tpu.memory_space<vmem>>, vector<8x16xf32>
    %1 = arith.truncf %0 : vector<8x16xf32> to vector<8x16xbf16>
    %c0_1 = arith.constant 0 : index
    %c0_2 = arith.constant 0 : index
    %2 = vector.load %arg4[%c0_1, %c0_2] : memref<128x3xf32, #tpu.memory_space<vmem>>, vector<128x1xf32>
    %c0_3 = arith.constant 0 : index
    %c1 = arith.constant 1 : index
    %3 = vector.load %arg4[%c0_3, %c1] : memref<128x3xf32, #tpu.memory_space<vmem>>, vector<128x1xf32>
    %c0_4 = arith.constant 0 : index
    %c2 = arith.constant 2 : index
    %4 = vector.load %arg4[%c0_4, %c2] : memref<128x3xf32, #tpu.memory_space<vmem>>, vector<128x1xf32>
    %c0_5 = arith.constant 0 : index
    %c0_6 = arith.constant 0 : index
    %5 = vector.load %arg2[%c0_5, %c0_6] : memref<128x16xbf16, #tpu.memory_space<vmem>>, vector<128x16xbf16>
    %cst = arith.constant dense<0.000000e+00> : vector<128x8xf32>
    %6 = tpu.matmul %5, %1, %cst {dimension_numbers = #tpu.dot_dimension_numbers<[1], [1], [0], [0], [0, 0, 1, 0], [], []>} : vector<128x16xbf16>, vector<8x16xbf16>, vector<128x8xf32> -> vector<128x8xf32>
    %7 = vector.broadcast %2 : vector<128x1xf32> to vector<128x8xf32>
    %8 = arith.addf %6, %7 : vector<128x8xf32>
    %cst_7 = arith.constant 0.000000e+00 : f32
    %9 = vector.broadcast %cst_7 : f32 to vector<128x8xf32>
    %10 = arith.maximumf %8, %9 : vector<128x8xf32>
    %11 = arith.truncf %10 : vector<128x8xf32> to vector<128x8xbf16>
    %c0_8 = arith.constant 0 : index
    %c0_9 = arith.constant 0 : index
    %12 = vector.load %arg3[%c0_8, %c0_9] : memref<128x128xbf16, #tpu.memory_space<vmem>>, vector<128x128xbf16>
    %cst_10 = arith.constant dense<0.000000e+00> : vector<128x8xf32>
    %13 = tpu.matmul %12, %11, %cst_10 {dimension_numbers = #tpu.dot_dimension_numbers<[1], [0], [0], [1], [0, 0, 1, 1], [], []>} : vector<128x128xbf16>, vector<128x8xbf16>, vector<128x8xf32> -> vector<128x8xf32>
    %14 = vector.broadcast %3 : vector<128x1xf32> to vector<128x8xf32>
    %15 = arith.addf %13, %14 : vector<128x8xf32>
    %cst_11 = arith.constant 0.000000e+00 : f32
    %16 = vector.broadcast %cst_11 : f32 to vector<128x8xf32>
    %17 = arith.maximumf %15, %16 : vector<128x8xf32>
    %18 = vector.broadcast %4 : vector<128x1xf32> to vector<128x8xf32>
    %19 = arith.mulf %17, %18 : vector<128x8xf32>
    %cst_12 = arith.constant dense<0.000000e+00> : vector<8xf32>
    %20 = vector.multi_reduction <add>, %19, %cst_12 [0] : vector<128x8xf32> to vector<8xf32>
    %21 = vector.shape_cast %20 : vector<8xf32> to vector<1x8xf32>
    %c0_13 = arith.constant 0 : index
    %c0_14 = arith.constant 0 : index
    %22 = memref.load %arg5[%c0_13, %c0_14] : memref<1x1xf32, #tpu.memory_space<smem>>
    %23 = vector.broadcast %22 : f32 to vector<1x8xf32>
    %24 = arith.addf %21, %23 : vector<1x8xf32>
    %c0_15 = arith.constant 0 : index
    %c0_16 = arith.constant 0 : index
    %25 = vector.load %arg6[%c0_15, %c0_16] : memref<1x8xf32, #tpu.memory_space<vmem>>, vector<1x8xf32>
    tpu.vector_store %arg6[%c0_15, %c0_16], %24 {strides = array<i32>} : memref<1x8xf32, #tpu.memory_space<vmem>>, vector<1x8xf32>,
    return
  }
  func.func @transform_0(%arg0: i32) -> (i32, i32) {
    %c0_i32 = arith.constant 0 : i32
    %c0_i32_0 = arith.constant 0 : i32
    return %arg0, %c0_i32 : i32, i32
  }
  func.func @transform_1(%arg0: i32) -> (i32, i32) {
    %c0_i32 = arith.constant 0 : i32
    %c0_i32_0 = arith.constant 0 : i32
    %c0_i32_1 = arith.constant 0 : i32
    return %c0_i32, %c0_i32_0 : i32, i32
  }
  func.func @transform_2(%arg0: i32) -> (i32, i32) {
    %c0_i32 = arith.constant 0 : i32
    %c0_i32_0 = arith.constant 0 : i32
    %c0_i32_1 = arith.constant 0 : i32
    return %c0_i32, %c0_i32_0 : i32, i32
  }
  func.func @transform_3(%arg0: i32) -> (i32, i32) {
    %c0_i32 = arith.constant 0 : i32
    %c0_i32_0 = arith.constant 0 : i32
    %c0_i32_1 = arith.constant 0 : i32
    return %c0_i32, %c0_i32_0 : i32, i32
  }
  func.func @transform_4(%arg0: i32) -> (i32, i32) {
    %c0_i32 = arith.constant 0 : i32
    %c0_i32_0 = arith.constant 0 : i32
    %c0_i32_1 = arith.constant 0 : i32
    return %c0_i32, %c0_i32_0 : i32, i32
  }
  func.func @transform_5(%arg0: i32) -> (i32, i32) {
    %c0_i32 = arith.constant 0 : i32
    %c0_i32_0 = arith.constant 0 : i32
    return %c0_i32, %arg0 : i32, i32
  }
}

</mosaic_0001>

<llo_original>
// kernel: tpu_custom_call.1
$region0: #{tpu_custom_call.1}
  #allocation0 [shape = 'u32[]', space=smem, size = 0x4, offset = 0x4, fixed_abs, tag = 'smem constant byte address 0x4 - core index']
  #allocation1 [shape = 'u32[144,128]{1,0:T(1,128)}', space=vmem, size = 0x12000, scoped, tag = 'internal scratch']
  #allocation2 [shape = 'f32[1,1]{1,0:T(1,128)S(6)}', space=smem, size = 0x200, scoped, tag = 'scoped memory for tpu_custom_call.1']
  %s0 = inlined_call_operand.vmem [shape: f32[8,16], index: 0, kind: input, shape index: {}]
  %s1 = inlined_call_operand.vmem [shape: bf16[128,16], index: 1, kind: input, shape index: {}]
  %s2 = inlined_call_operand.vmem [shape: bf16[128,128], index: 2, kind: input, shape index: {}]
  %s3 = inlined_call_operand.vmem [shape: f32[128,3], index: 3, kind: input, shape index: {}]
  %s4 = inlined_call_operand.<no memory space> [shape: f32[1,1], index: 4, kind: input, shape index: {}]
  %s5 = inlined_call_operand.hbm [shape: f32[1,8], index: 5, kind: output, shape index: {}]
  %s6 = sld [smem:[#allocation0]]
  $region30: #{tpu_custom_call.1} parent=0
    _
  %s8 = ssub.s32 1, %s6
  %s9 = scalar_select 0, %s8, %s6
  %10 = sst [smem:[#allocation2]] %s4
  $region1: #{tpu_custom_call.1} parent=0
    #allocation3 [shape = 'u8[512]{0}', space=vmem, size = 0x400, scoped, tag = 'output window, operand 0, single buffered']
    #allocation4 [shape = 's32[1]{0}', space=sflag, size = 0x4, scoped, tag = 'scoped memory for tpu_custom_call.1']
    %11 = vsyncpa [#allocation4], 0
    // Predicated region
    $region2: #{tpu_custom_call.1} parent=1 // pred_check
      _
    $region3: #{tpu_custom_call.1} parent=1 // pred_check_branch
      %13 = sbr.rel (0) target = $region5
    $region4: #{tpu_custom_call.1} parent=1 // pred_region
      _
    $region5: #{tpu_custom_call.1} parent=1 // pred_fallthru
      _
    // Predicated region
    $region6: #{tpu_custom_call.1} parent=1 // pred_check
      _
    $region7: #{tpu_custom_call.1} parent=1 // pred_check_branch
      %15 = sbr.rel (0) target = $region9
    $region8: #{tpu_custom_call.1} parent=1 // pred_region
      _
    $region9: #{tpu_custom_call.1} parent=1 // pred_fallthru
      _
    // Predicated region
    $region10: #{tpu_custom_call.1} parent=1 // pred_check
      _
    $region11: #{tpu_custom_call.1} parent=1 // pred_check_branch
      %17 = sbr.rel (0) target = $region13
    $region12: #{tpu_custom_call.1} parent=1 // pred_region
      _
    $region13: #{tpu_custom_call.1} parent=1 // pred_fallthru
      _
    // Predicated region
    $region14: #{tpu_custom_call.1} parent=1 // pred_check
      _
    $region15: #{tpu_custom_call.1} parent=1 // pred_check_branch
      %19 = sbr.rel (0) target = $region17
    $region16: #{tpu_custom_call.1} parent=1 // pred_region
      _
    $region17: #{tpu_custom_call.1} parent=1 // pred_fallthru
      _
    // Predicated region
    $region18: #{tpu_custom_call.1} parent=1 // pred_check
      _
    $region19: #{tpu_custom_call.1} parent=1 // pred_check_branch
      %21 = sbr.rel (0) target = $region21
    $region20: #{tpu_custom_call.1} parent=1 // pred_region
      _
    $region21: #{tpu_custom_call.1} parent=1 // pred_fallthru
      _
    %v23 = vld [vmem:[%s0] sm:$0xff]
    %v24 = vpack.c.bf16 %v23, %v23
    %v25 = vld [vmem:[%s3] sm:$0xff]
    %v26 = vld [vmem:[%s3 + $0x8] sm:$0xff]
    %v27 = vld [vmem:[%s3 + $0x10] sm:$0xff]
    %v28 = vld [vmem:[%s3 + $0x18] sm:$0xff]
    %v29 = vld [vmem:[%s3 + $0x20] sm:$0xff]
    %v30 = vld [vmem:[%s3 + $0x28] sm:$0xff]
    %v31 = vld [vmem:[%s3 + $0x30] sm:$0xff]
    %v32 = vld [vmem:[%s3 + $0x38] sm:$0xff]
    %v33 = vld [vmem:[%s3 + $0x40] sm:$0xff]
    %v34 = vld [vmem:[%s3 + $0x48] sm:$0xff]
    %v35 = vld [vmem:[%s3 + $0x50] sm:$0xff]
    %v36 = vld [vmem:[%s3 + $0x58] sm:$0xff]
    %v37 = vld [vmem:[%s3 + $0x60] sm:$0xff]
    %v38 = vld [vmem:[%s3 + $0x68] sm:$0xff]
    %v39 = vld [vmem:[%s3 + $0x70] sm:$0xff]
    %v40 = vld [vmem:[%s3 + $0x78] sm:$0xff]
    %v41 = vld [vmem:[%s1] sm:$0xf]
    %v42 = vld [vmem:[%s1 + $0x4] sm:$0xf]
    %v43 = vld [vmem:[%s1 + $0x8] sm:$0xf]
    %v44 = vld [vmem:[%s1 + $0xc] sm:$0xf]
    %v45 = vld [vmem:[%s1 + $0x10] sm:$0xf]
    %v46 = vld [vmem:[%s1 + $0x14] sm:$0xf]
    %v47 = vld [vmem:[%s1 + $0x18] sm:$0xf]
    %v48 = vld [vmem:[%s1 + $0x1c] sm:$0xf]
    %v49 = vld [vmem:[%s1 + $0x20] sm:$0xf]
    %v50 = vld [vmem:[%s1 + $0x24] sm:$0xf]
    %v51 = vld [vmem:[%s1 + $0x28] sm:$0xf]
    %v52 = vld [vmem:[%s1 + $0x2c] sm:$0xf]
    %v53 = vld [vmem:[%s1 + $0x30] sm:$0xf]
    %v54 = vld [vmem:[%s1 + $0x34] sm:$0xf]
    %v55 = vld [vmem:[%s1 + $0x38] sm:$0xf]
    %v56 = vld [vmem:[%s1 + $0x3c] sm:$0xf]
    %58 = vset.pattern.permute.xlu0 0
    %59 = vperm.xlu0 %58, %v25
    %v60 = vpop.permute.xlu0 %59
    %63 = vset.pattern.permute.xlu0 0
    %64 = vperm.xlu0 %63, %v26
    %v65 = vpop.permute.xlu0 %64
    %68 = vset.pattern.permute.xlu0 0
    %69 = vperm.xlu0 %68, %v27
    %v70 = vpop.permute.xlu0 %69
    %73 = vset.pattern.permute.xlu0 0
    %74 = vperm.xlu0 %73, %v28
    %v75 = vpop.permute.xlu0 %74
    %78 = vset.pattern.permute.xlu0 0
    %79 = vperm.xlu0 %78, %v29
    %v80 = vpop.permute.xlu0 %79
    %83 = vset.pattern.permute.xlu0 0
    %84 = vperm.xlu0 %83, %v30
    %v85 = vpop.permute.xlu0 %84
    %88 = vset.pattern.permute.xlu0 0
    %89 = vperm.xlu0 %88, %v31
    %v90 = vpop.permute.xlu0 %89
    %93 = vset.pattern.permute.xlu0 0
    %94 = vperm.xlu0 %93, %v32
    %v95 = vpop.permute.xlu0 %94
    %98 = vset.pattern.permute.xlu0 0
    %99 = vperm.xlu0 %98, %v33
    %v100 = vpop.permute.xlu0 %99
    %103 = vset.pattern.permute.xlu0 0
    %104 = vperm.xlu0 %103, %v34
    %v105 = vpop.permute.xlu0 %104
    %108 = vset.pattern.permute.xlu0 0
    %109 = vperm.xlu0 %108, %v35
    %v110 = vpop.permute.xlu0 %109
    %113 = vset.pattern.permute.xlu0 0
    %114 = vperm.xlu0 %113, %v36
    %v115 = vpop.permute.xlu0 %114
    %118 = vset.pattern.permute.xlu0 0
    %119 = vperm.xlu0 %118, %v37
    %v120 = vpop.permute.xlu0 %119
    %123 = vset.pattern.permute.xlu0 0
    %124 = vperm.xlu0 %123, %v38
    %v125 = vpop.permute.xlu0 %124
    %128 = vset.pattern.permute.xlu0 0
    %129 = vperm.xlu0 %128, %v39
    %v130 = vpop.permute.xlu0 %129
    %133 = vset.pattern.permute.xlu0 0
    %134 = vperm.xlu0 %133, %v40
    %v135 = vpop.permute.xlu0 %134
    %v153 = vunpack.c.l.b16 %v41
    %v154 = vunpack.c.l.b16 %v42
    %v155 = vunpack.c.l.b16 %v43
    %v156 = vunpack.c.l.b16 %v44
    %v157 = vunpack.c.l.b16 %v45
    %v158 = vunpack.c.l.b16 %v46
    %v159 = vunpack.c.l.b16 %v47
    %v160 = vunpack.c.l.b16 %v48
    %v161 = vunpack.c.l.b16 %v49
    %v162 = vunpack.c.l.b16 %v50
    %v163 = vunpack.c.l.b16 %v51
    %v164 = vunpack.c.l.b16 %v52
    %v165 = vunpack.c.l.b16 %v53
    %v166 = vunpack.c.l.b16 %v54
    %v167 = vunpack.c.l.b16 %v55
    %v168 = vunpack.c.l.b16 %v56
    %v169 = vpack.c.b16 %v154, %v153
    %v170 = vpack.c.b16 %v156, %v155
    %v171 = vpack.c.b16 %v158, %v157
    %v172 = vpack.c.b16 %v160, %v159
    %v173 = vpack.c.b16 %v162, %v161
    %v174 = vpack.c.b16 %v164, %v163
    %v175 = vpack.c.b16 %v166, %v165
    %v176 = vpack.c.b16 %v168, %v167
    %vm177 = vcmask 130048
    %v179 = vsel %vm177, %v169, 0
    %v182 = vsel %vm177, %v170, 0
    %v185 = vsel %vm177, %v171, 0
    %v188 = vsel %vm177, %v172, 0
    %v191 = vsel %vm177, %v173, 0
    %v194 = vsel %vm177, %v174, 0
    %v197 = vsel %vm177, %v175, 0
    %v200 = vsel %vm177, %v176, 0
    %v203 = vsel %vm177, %v24, 0
    %205 = vmatprep.subr.bf16.mxu0 0
    %206 = vmatpush1.bf16.xpose.msra.mxu0 %v203
    %207 = vmatprep.subr.bf16.mxu0 0
    %208 = vmatpush1.bf16.xpose.msra.mxu0 0
    %209 = vmatprep.subr.bf16.mxu0 0
    %210 = vmatpush1.bf16.xpose.msra.mxu0 0
    %211 = vmatprep.subr.bf16.mxu0 0
    %212 = vmatpush1.bf16.xpose.msra.mxu0 0
    %213 = vmatprep.subr.bf16.mxu0 0
    %214 = vmatpush1.bf16.xpose.msra.mxu0 0
    %215 = vmatprep.subr.bf16.mxu0 0
    %216 = vmatpush1.bf16.xpose.msra.mxu0 0
    %217 = vmatprep.subr.bf16.mxu0 0
    %218 = vmatpush1.bf16.xpose.msra.mxu0 0
    %219 = vmatprep.subr.bf16.mxu0 0
    %220 = vmatpush1.bf16.xpose.msra.mxu0 0
    %221 = vmatprep.subr.bf16.mxu0 0
    %222 = vmatpush1.bf16.xpose.msra.mxu0 0
    %223 = vmatprep.subr.bf16.mxu0 0
    %224 = vmatpush1.bf16.xpose.msra.mxu0 0
    %225 = vmatprep.subr.bf16.mxu0 0
    %226 = vmatpush1.bf16.xpose.msra.mxu0 0
    %227 = vmatprep.subr.bf16.mxu0 0
    %228 = vmatpush1.bf16.xpose.msra.mxu0 0
    %229 = vmatprep.subr.bf16.mxu0 0
    %230 = vmatpush1.bf16.xpose.msra.mxu0 0
    %231 = vmatprep.subr.bf16.mxu0 0
    %232 = vmatpush1.bf16.xpose.msra.mxu0 0
    %233 = vmatprep.subr.bf16.mxu0 0
    %234 = vmatpush1.bf16.xpose.msra.mxu0 0
    %235 = vmatprep.subr.bf16.mxu0 0
    %236 = vmatpush1.bf16.xpose.msra.mxu0 0
    %237 = vmatprep.mubr.bf16.mxu0 0
    %238 = vmatmul.mubr.bf16.gmra.mrb[0].mxu0 %v179
    %v239 = vpop.f32.mrb[0].mxu0
    %v240 = vadd.f32 %v60, %v239
    %v241 = vpop.f32.mrb[0].mxu0
    %v242 = vpop.f32.mrb[0].mxu0
    %v243 = vadd.f32 %v65, %v242
    %v244 = vpop.f32.mrb[0].mxu0
    %245 = vmatprep.mubr.bf16.mxu0 0
    %246 = vmatmul.mubr.bf16.gmra.mrb[0].mxu0 %v182
    %v247 = vpop.f32.mrb[0].mxu0
    %v248 = vadd.f32 %v70, %v247
    %v249 = vpop.f32.mrb[0].mxu0
    %v250 = vpop.f32.mrb[0].mxu0
    %v251 = vadd.f32 %v75, %v250
    %v252 = vpop.f32.mrb[0].mxu0
    %253 = vmatprep.mubr.bf16.mxu0 0
    %254 = vmatmul.mubr.bf16.gmra.mrb[0].mxu0 %v185
    %v255 = vpop.f32.mrb[0].mxu0
    %v256 = vadd.f32 %v80, %v255
    %v257 = vpop.f32.mrb[0].mxu0
    %v258 = vpop.f32.mrb[0].mxu0
    %v259 = vadd.f32 %v85, %v258
    %v260 = vpop.f32.mrb[0].mxu0
    %261 = vmatprep.mubr.bf16.mxu0 0
    %262 = vmatmul.mubr.bf16.gmra.mrb[0].mxu0 %v188
    %v263 = vpop.f32.mrb[0].mxu0
    %v264 = vadd.f32 %v90, %v263
    %v265 = vpop.f32.mrb[0].mxu0
    %v266 = vpop.f32.mrb[0].mxu0
    %v267 = vadd.f32 %v95, %v266
    %v268 = vpop.f32.mrb[0].mxu0
    %269 = vmatprep.mubr.bf16.mxu0 0
    %270 = vmatmul.mubr.bf16.gmra.mrb[0].mxu0 %v191
    %v271 = vpop.f32.mrb[0].mxu0
    %v272 = vadd.f32 %v100, %v271
    %v273 = vpop.f32.mrb[0].mxu0
    %v274 = vpop.f32.mrb[0].mxu0
    %v275 = vadd.f32 %v105, %v274
    %v276 = vpop.f32.mrb[0].mxu0
    %277 = vmatprep.mubr.bf16.mxu0 0
    %278 = vmatmul.mubr.bf16.gmra.mrb[0].mxu0 %v194
    %v279 = vpop.f32.mrb[0].mxu0
    %v280 = vadd.f32 %v110, %v279
    %v281 = vpop.f32.mrb[0].mxu0
    %v282 = vpop.f32.mrb[0].mxu0
    %v283 = vadd.f32 %v115, %v282
    %v284 = vpop.f32.mrb[0].mxu0
    %285 = vmatprep.mubr.bf16.mxu0 0
    %286 = vmatmul.mubr.bf16.gmra.mrb[0].mxu0 %v197
    %v287 = vpop.f32.mrb[0].mxu0
    %v288 = vadd.f32 %v120, %v287
    %v289 = vpop.f32.mrb[0].mxu0
    %v290 = vpop.f32.mrb[0].mxu0
    %v291 = vadd.f32 %v125, %v290
    %v292 = vpop.f32.mrb[0].mxu0
    %293 = vmatprep.mubr.bf16.mxu0 0
    %294 = vmatmul.mubr.bf16.gmra.mrb[0].mxu0 %v200
    %v295 = vpop.f32.mrb[0].mxu0
    %v296 = vadd.f32 %v130, %v295
    %v297 = vpop.f32.mrb[0].mxu0
    %v298 = vpop.f32.mrb[0].mxu0
    %v299 = vadd.f32 %v135, %v298
    %v300 = vpop.f32.mrb[0].mxu0
    %301 = vdwg.mxu0
    %v302 = vmax.f32 %v240, 0.0
    %v303 = vmax.f32 %v243, 0.0
    %v304 = vmax.f32 %v248, 0.0
    %v305 = vmax.f32 %v251, 0.0
    %v306 = vmax.f32 %v256, 0.0
    %v307 = vmax.f32 %v259, 0.0
    %v308 = vmax.f32 %v264, 0.0
    %v309 = vmax.f32 %v267, 0.0
    %v310 = vmax.f32 %v272, 0.0
    %v311 = vmax.f32 %v275, 0.0
    %v312 = vmax.f32 %v280, 0.0
    %v313 = vmax.f32 %v283, 0.0
    %v314 = vmax.f32 %v288, 0.0
    %v315 = vmax.f32 %v291, 0.0
    %v316 = vmax.f32 %v296, 0.0
    %v317 = vmax.f32 %v299, 0.0
    %v318 = vpack.c.bf16 %v303, %v302
    %v319 = vpack.c.bf16 %v305, %v304
    %v320 = vpack.c.bf16 %v307, %v306
    %v321 = vpack.c.bf16 %v309, %v308
    %v322 = vpack.c.bf16 %v311, %v310
    %v323 = vpack.c.bf16 %v313, %v312
    %v324 = vpack.c.bf16 %v315, %v314
    %v325 = vpack.c.bf16 %v317, %v316
    %v326 = vld [vmem:[%s2] sm:$0xf]
    %v327 = vld [vmem:[%s2 + $0x4] sm:$0xf]
    %v328 = vld [vmem:[%s2 + $0x8] sm:$0xf]
    %v329 = vld [vmem:[%s2 + $0xc] sm:$0xf]
    %v330 = vld [vmem:[%s2 + $0x10] sm:$0xf]
    %v331 = vld [vmem:[%s2 + $0x14] sm:$0xf]
    %v332 = vld [vmem:[%s2 + $0x18] sm:$0xf]
    %v333 = vld [vmem:[%s2 + $0x1c] sm:$0xf]
    %v334 = vld [vmem:[%s2 + $0x20] sm:$0xf]
    %v335 = vld [vmem:[%s2 + $0x24] sm:$0xf]
    %v336 = vld [vmem:[%s2 + $0x28] sm:$0xf]
    %v337 = vld [vmem:[%s2 + $0x2c] sm:$0xf]
    %v338 = vld [vmem:[%s2 + $0x30] sm:$0xf]
    %v339 = vld [vmem:[%s2 + $0x34] sm:$0xf]
    %v340 = vld [vmem:[%s2 + $0x38] sm:$0xf]
    %v341 = vld [vmem:[%s2 + $0x3c] sm:$0xf]
    %342 = vset.pattern.permute.xlu0 1
    %343 = vperm.xlu0 %342, %v25
    %v344 = vpop.permute.xlu0 %343
    %346 = vset.pattern.permute.xlu0 1
    %347 = vperm.xlu0 %346, %v26
    %v348 = vpop.permute.xlu0 %347
    %350 = vset.pattern.permute.xlu0 1
    %351 = vperm.xlu0 %350, %v27
    %v352 = vpop.permute.xlu0 %351
    %354 = vset.pattern.permute.xlu0 1
    %355 = vperm.xlu0 %354, %v28
    %v356 = vpop.permute.xlu0 %355
    %358 = vset.pattern.permute.xlu0 1
    %359 = vperm.xlu0 %358, %v29
    %v360 = vpop.permute.xlu0 %359
    %362 = vset.pattern.permute.xlu0 1
    %363 = vperm.xlu0 %362, %v30
    %v364 = vpop.permute.xlu0 %363
    %366 = vset.pattern.permute.xlu0 1
    %367 = vperm.xlu0 %366, %v31
    %v368 = vpop.permute.xlu0 %367
    %370 = vset.pattern.permute.xlu0 1
    %371 = vperm.xlu0 %370, %v32
    %v372 = vpop.permute.xlu0 %371
    %374 = vset.pattern.permute.xlu0 1
    %375 = vperm.xlu0 %374, %v33
    %v376 = vpop.permute.xlu0 %375
    %378 = vset.pattern.permute.xlu0 1
    %379 = vperm.xlu0 %378, %v34
    %v380 = vpop.permute.xlu0 %379
    %382 = vset.pattern.permute.xlu0 1
    %383 = vperm.xlu0 %382, %v35
    %v384 = vpop.permute.xlu0 %383
    %386 = vset.pattern.permute.xlu0 1
    %387 = vperm.xlu0 %386, %v36
    %v388 = vpop.permute.xlu0 %387
    %390 = vset.pattern.permute.xlu0 1
    %391 = vperm.xlu0 %390, %v37
    %v392 = vpop.permute.xlu0 %391
    %394 = vset.pattern.permute.xlu0 1
    %395 = vperm.xlu0 %394, %v38
    %v396 = vpop.permute.xlu0 %395
    %398 = vset.pattern.permute.xlu0 1
    %399 = vperm.xlu0 %398, %v39
    %v400 = vpop.permute.xlu0 %399
    %402 = vset.pattern.permute.xlu0 1
    %403 = vperm.xlu0 %402, %v40
    %v404 = vpop.permute.xlu0 %403
    %v422 = vunpack.c.l.b16 %v326
    %v423 = vunpack.c.l.b16 %v327
    %v424 = vunpack.c.l.b16 %v328
    %v425 = vunpack.c.l.b16 %v329
    %v426 = vunpack.c.l.b16 %v330
    %v427 = vunpack.c.l.b16 %v331
    %v428 = vunpack.c.l.b16 %v332
    %v429 = vunpack.c.l.b16 %v333
    %v430 = vunpack.c.l.b16 %v334
    %v431 = vunpack.c.l.b16 %v335
    %v432 = vunpack.c.l.b16 %v336
    %v433 = vunpack.c.l.b16 %v337
    %v434 = vunpack.c.l.b16 %v338
    %v435 = vunpack.c.l.b16 %v339
    %v436 = vunpack.c.l.b16 %v340
    %v437 = vunpack.c.l.b16 %v341
    %v438 = vpack.c.b16 %v423, %v422
    %v439 = vpack.c.b16 %v425, %v424
    %v440 = vpack.c.b16 %v427, %v426
    %v441 = vpack.c.b16 %v429, %v428
    %v442 = vpack.c.b16 %v431, %v430
    %v443 = vpack.c.b16 %v433, %v432
    %v444 = vpack.c.b16 %v435, %v434
    %v445 = vpack.c.b16 %v437, %v436
    %454 = vmatprep.subr.bf16.mxu0 0
    %455 = vmatpush1.bf16.msra.mxu0 %v318
    %456 = vmatprep.subr.bf16.mxu0 0
    %457 = vmatpush1.bf16.msra.mxu0 %v319
    %458 = vmatprep.subr.bf16.mxu0 0
    %459 = vmatpush1.bf16.msra.mxu0 %v320
    %460 = vmatprep.subr.bf16.mxu0 0
    %461 = vmatpush1.bf16.msra.mxu0 %v321
    %462 = vmatprep.subr.bf16.mxu0 0
    %463 = vmatpush1.bf16.msra.mxu0 %v322
    %464 = vmatprep.subr.bf16.mxu0 0
    %465 = vmatpush1.bf16.msra.mxu0 %v323
    %466 = vmatprep.subr.bf16.mxu0 0
    %467 = vmatpush1.bf16.msra.mxu0 %v324
    %468 = vmatprep.subr.bf16.mxu0 0
    %469 = vmatpush1.bf16.msra.mxu0 %v325
    %470 = vmatprep.subr.bf16.mxu0 0
    %471 = vmatpush1.bf16.msra.mxu0 0
    %472 = vmatprep.subr.bf16.mxu0 0
    %473 = vmatpush1.bf16.msra.mxu0 0
    %474 = vmatprep.subr.bf16.mxu0 0
    %475 = vmatpush1.bf16.msra.mxu0 0
    %476 = vmatprep.subr.bf16.mxu0 0
    %477 = vmatpush1.bf16.msra.mxu0 0
    %478 = vmatprep.subr.bf16.mxu0 0
    %479 = vmatpush1.bf16.msra.mxu0 0
    %480 = vmatprep.subr.bf16.mxu0 0
    %481 = vmatpush1.bf16.msra.mxu0 0
    %482 = vmatprep.subr.bf16.mxu0 0
    %483 = vmatpush1.bf16.msra.mxu0 0
    %484 = vmatprep.subr.bf16.mxu0 0
    %485 = vmatpush1.bf16.msra.mxu0 0
    %486 = vmatprep.mubr.bf16.mxu0 0
    %487 = vmatmul.mubr.bf16.gmra.mrb[0].mxu0 %v438
    %v488 = vpop.f32.mrb[0].mxu0
    %v489 = vadd.f32 %v344, %v488
    %v490 = vpop.f32.mrb[0].mxu0
    %v491 = vpop.f32.mrb[0].mxu0
    %v492 = vadd.f32 %v348, %v491
    %v493 = vpop.f32.mrb[0].mxu0
    %494 = vmatprep.mubr.bf16.mxu0 0
    %495 = vmatmul.mubr.bf16.gmra.mrb[0].mxu0 %v439
    %v496 = vpop.f32.mrb[0].mxu0
    %v497 = vadd.f32 %v352, %v496
    %v498 = vpop.f32.mrb[0].mxu0
    %v499 = vpop.f32.mrb[0].mxu0
    %v500 = vadd.f32 %v356, %v499
    %v501 = vpop.f32.mrb[0].mxu0
    %502 = vmatprep.mubr.bf16.mxu0 0
    %503 = vmatmul.mubr.bf16.gmra.mrb[0].mxu0 %v440
    %v504 = vpop.f32.mrb[0].mxu0
    %v505 = vadd.f32 %v360, %v504
    %v506 = vpop.f32.mrb[0].mxu0
    %v507 = vpop.f32.mrb[0].mxu0
    %v508 = vadd.f32 %v364, %v507
    %v509 = vpop.f32.mrb[0].mxu0
    %510 = vmatprep.mubr.bf16.mxu0 0
    %511 = vmatmul.mubr.bf16.gmra.mrb[0].mxu0 %v441
    %v512 = vpop.f32.mrb[0].mxu0
    %v513 = vadd.f32 %v368, %v512
    %v514 = vpop.f32.mrb[0].mxu0
    %v515 = vpop.f32.mrb[0].mxu0
    %v516 = vadd.f32 %v372, %v515
    %v517 = vpop.f32.mrb[0].mxu0
    %518 = vmatprep.mubr.bf16.mxu0 0
    %519 = vmatmul.mubr.bf16.gmra.mrb[0].mxu0 %v442
    %v520 = vpop.f32.mrb[0].mxu0
    %v521 = vadd.f32 %v376, %v520
    %v522 = vpop.f32.mrb[0].mxu0
    %v523 = vpop.f32.mrb[0].mxu0
    %v524 = vadd.f32 %v380, %v523
    %v525 = vpop.f32.mrb[0].mxu0
    %526 = vmatprep.mubr.bf16.mxu0 0
    %527 = vmatmul.mubr.bf16.gmra.mrb[0].mxu0 %v443
    %v528 = vpop.f32.mrb[0].mxu0
    %v529 = vadd.f32 %v384, %v528
    %v530 = vpop.f32.mrb[0].mxu0
    %v531 = vpop.f32.mrb[0].mxu0
    %v532 = vadd.f32 %v388, %v531
    %v533 = vpop.f32.mrb[0].mxu0
    %534 = vmatprep.mubr.bf16.mxu0 0
    %535 = vmatmul.mubr.bf16.gmra.mrb[0].mxu0 %v444
    %v536 = vpop.f32.mrb[0].mxu0
    %v537 = vadd.f32 %v392, %v536
    %v538 = vpop.f32.mrb[0].mxu0
    %v539 = vpop.f32.mrb[0].mxu0
    %v540 = vadd.f32 %v396, %v539
    %v541 = vpop.f32.mrb[0].mxu0
    %542 = vmatprep.mubr.bf16.mxu0 0
    %543 = vmatmul.mubr.bf16.gmra.mrb[0].mxu0 %v445
    %v544 = vpop.f32.mrb[0].mxu0
    %v545 = vadd.f32 %v400, %v544
    %v546 = vpop.f32.mrb[0].mxu0
    %v547 = vpop.f32.mrb[0].mxu0
    %v548 = vadd.f32 %v404, %v547
    %v549 = vpop.f32.mrb[0].mxu0
    %550 = vdwg.mxu0
    %v551 = vmax.f32 %v489, 0.0
    %v552 = vmax.f32 %v492, 0.0
    %v553 = vmax.f32 %v497, 0.0
    %v554 = vmax.f32 %v500, 0.0
    %v555 = vmax.f32 %v505, 0.0
    %v556 = vmax.f32 %v508, 0.0
    %v557 = vmax.f32 %v513, 0.0
    %v558 = vmax.f32 %v516, 0.0
    %v559 = vmax.f32 %v521, 0.0
    %v560 = vmax.f32 %v524, 0.0
    %v561 = vmax.f32 %v529, 0.0
    %v562 = vmax.f32 %v532, 0.0
    %v563 = vmax.f32 %v537, 0.0
    %v564 = vmax.f32 %v540, 0.0
    %v565 = vmax.f32 %v545, 0.0
    %v566 = vmax.f32 %v548, 0.0
    %567 = vset.pattern.permute.xlu0 2
    %568 = vperm.xlu0 %567, %v25
    %v569 = vpop.permute.xlu0 %568
    %571 = vset.pattern.permute.xlu0 2
    %572 = vperm.xlu0 %571, %v26
    %v573 = vpop.permute.xlu0 %572
    %575 = vset.pattern.permute.xlu0 2
    %576 = vperm.xlu0 %575, %v27
    %v577 = vpop.permute.xlu0 %576
    %579 = vset.pattern.permute.xlu0 2
    %580 = vperm.xlu0 %579, %v28
    %v581 = vpop.permute.xlu0 %580
    %583 = vset.pattern.permute.xlu0 2
    %584 = vperm.xlu0 %583, %v29
    %v585 = vpop.permute.xlu0 %584
    %587 = vset.pattern.permute.xlu0 2
    %588 = vperm.xlu0 %587, %v30
    %v589 = vpop.permute.xlu0 %588
    %591 = vset.pattern.permute.xlu0 2
    %592 = vperm.xlu0 %591, %v31
    %v593 = vpop.permute.xlu0 %592
    %595 = vset.pattern.permute.xlu0 2
    %596 = vperm.xlu0 %595, %v32
    %v597 = vpop.permute.xlu0 %596
    %599 = vset.pattern.permute.xlu0 2
    %600 = vperm.xlu0 %599, %v33
    %v601 = vpop.permute.xlu0 %600
    %603 = vset.pattern.permute.xlu0 2
    %604 = vperm.xlu0 %603, %v34
    %v605 = vpop.permute.xlu0 %604
    %607 = vset.pattern.permute.xlu0 2
    %608 = vperm.xlu0 %607, %v35
    %v609 = vpop.permute.xlu0 %608
    %611 = vset.pattern.permute.xlu0 2
    %612 = vperm.xlu0 %611, %v36
    %v613 = vpop.permute.xlu0 %612
    %615 = vset.pattern.permute.xlu0 2
    %616 = vperm.xlu0 %615, %v37
    %v617 = vpop.permute.xlu0 %616
    %619 = vset.pattern.permute.xlu0 2
    %620 = vperm.xlu0 %619, %v38
    %v621 = vpop.permute.xlu0 %620
    %623 = vset.pattern.permute.xlu0 2
    %624 = vperm.xlu0 %623, %v39
    %v625 = vpop.permute.xlu0 %624
    %627 = vset.pattern.permute.xlu0 2
    %628 = vperm.xlu0 %627, %v40
    %v629 = vpop.permute.xlu0 %628
    %v631 = vmul.f32 %v551, %v569
    %v632 = vmul.f32 %v552, %v573
    %v633 = vmul.f32 %v553, %v577
    %v634 = vmul.f32 %v554, %v581
    %v635 = vmul.f32 %v555, %v585
    %v636 = vmul.f32 %v556, %v589
    %v637 = vmul.f32 %v557, %v593
    %v638 = vmul.f32 %v558, %v597
    %v639 = vmul.f32 %v559, %v601
    %v640 = vmul.f32 %v560, %v605
    %v641 = vmul.f32 %v561, %v609
    %v642 = vmul.f32 %v562, %v613
    %v643 = vmul.f32 %v563, %v617
    %v644 = vmul.f32 %v564, %v621
    %v645 = vmul.f32 %v565, %v625
    %v646 = vmul.f32 %v566, %v629
    %vm647 = vcmask 64512
    %v648 = vsel %vm647, %v631, 0.0
    %v649 = vsel %vm647, %v632, 0.0
    %v650 = vadd.f32 %v648, %v649
    %v651 = vsel %vm647, %v633, 0.0
    %v652 = vadd.f32 %v650, %v651
    %v653 = vsel %vm647, %v634, 0.0
    %v654 = vadd.f32 %v652, %v653
    %v655 = vsel %vm647, %v635, 0.0
    %v656 = vadd.f32 %v654, %v655
    %v657 = vsel %vm647, %v636, 0.0
    %v658 = vadd.f32 %v656, %v657
    %v659 = vsel %vm647, %v637, 0.0
    %v660 = vadd.f32 %v658, %v659
    %v661 = vsel %vm647, %v638, 0.0
    %v662 = vadd.f32 %v660, %v661
    %v663 = vsel %vm647, %v639, 0.0
    %v664 = vadd.f32 %v662, %v663
    %v665 = vsel %vm647, %v640, 0.0
    %v666 = vadd.f32 %v664, %v665
    %v667 = vsel %vm647, %v641, 0.0
    %v668 = vadd.f32 %v666, %v667
    %v669 = vsel %vm647, %v642, 0.0
    %v670 = vadd.f32 %v668, %v669
    %v671 = vsel %vm647, %v643, 0.0
    %v672 = vadd.f32 %v670, %v671
    %v673 = vsel %vm647, %v644, 0.0
    %v674 = vadd.f32 %v672, %v673
    %v675 = vsel %vm647, %v645, 0.0
    %v676 = vadd.f32 %v674, %v675
    %v677 = vsel %vm647, %v646, 0.0
    %v678 = vadd.f32 %v676, %v677
    %v679 = vrot.slane %v678, 4
    %v680 = vadd.f32 %v678, %v679
    %v681 = vrot.slane %v680, 2
    %v682 = vadd.f32 %v680, %v681
    %v683 = vrot.slane %v682, 1
    %v684 = vadd.f32 %v682, %v683
    %s685 = sld [smem:[#allocation2]]
    %v686 = vstv %s685
    %v687 = vadd.f32 %v684, %v686
    %vm688 = vcmask 57344
    %689 = vst.msk [vmem:[#allocation3] sm:$0x1] %vm688, %v687
    // Predicated region
    $region22: #{tpu_custom_call.1} parent=1 // pred_check
      _
    $region23: #{tpu_custom_call.1} parent=1 // pred_check_branch
      %691 = sbr.rel (0) target = $region25
    $region24: #{tpu_custom_call.1} parent=1 // pred_region
      %s693 = ssub.s32 16, 16
      %694 = vsyncadd [#allocation4], %s693
      %s696 = sshll.u32 [#allocation3], 4
      %s697 = int_to_ptr.vmem [resolvable:$true] %s696
      %699 = dma.vmem_to_hbm [thread:$0]  %s697, 16, %s5, [#allocation4]
    $region25: #{tpu_custom_call.1} parent=1 // pred_fallthru
      _
    // Predicated region
    $region26: #{tpu_custom_call.1} parent=1 // pred_check
      _
    $region27: #{tpu_custom_call.1} parent=1 // pred_check_branch
      %701 = sbr.rel (0) target = $region29
    $region28: #{tpu_custom_call.1} parent=1 // pred_region
      %702 = dma.done [#allocation4], 16
    $region29: #{tpu_custom_call.1} parent=1 // pred_fallthru
      _
    %703 = vsyncpa [#allocation4], 1

</llo_original>
